<compile_context>
chip_gen: v5e
topology: v5e:2x2
jax: 0.10.0
libtpu: 0.0.40
codegen_flags: <defaults>
</compile_context>

<pallas_src>
import jax
import jax.numpy as jnp
from jax.experimental import pallas as pl
from jax.experimental.pallas import tpu as pltpu

LANE = 128


def _round_up(x, m):
    return (x + m - 1) // m * m


def ner_kernel(x_ref, w1_ref, b1_ref, wf_ref, bf_ref, out_ref):
    # x_ref: (tm, E)       in compute dtype (f32 or bf16)
    # w1_ref: (E, H)       compute dtype
    # b1_ref: (1, H)       f32
    # wf_ref: (H, Cpad)    compute dtype  (fused W2 @ Wp, zero-padded to 128 lanes)
    # bf_ref: (1, Cpad)    f32            (fused b2 @ Wp, zero-padded)
    x = x_ref[...]
    h = jnp.dot(x, w1_ref[...], preferred_element_type=jnp.float32) + b1_ref[...]
    h = jnp.maximum(h, 0.0)                                   # ReLU
    out = jnp.dot(h.astype(wf_ref.dtype), wf_ref[...],
                  preferred_element_type=jnp.float32) + bf_ref[...]
    out_ref[...] = out.astype(out_ref.dtype)


def ner_forward(x2d, w1, b1, w_fused, b_fused, *, tm=512):
    """x2d: (T, E); w1: (E, H); b1: (1, H); w_fused: (H, Cpad); b_fused: (1, Cpad).

    Returns a lane-dense (T, Cpad) f32 slab; caller slices the real class columns.
    """
    T, E = x2d.shape
    H = w1.shape[1]
    Cpad = w_fused.shape[1]

    # Effective tile: big (amortize ~0.35us/step grid overhead) but ensure the grid
    # has at least 2 parallel steps when possible so both v7x TensorCores get work.
    t_half = max(8, _round_up(pl.cdiv(T, 2), 8))
    tm_eff = max(8, min(tm, t_half))
    T_pad = _round_up(T, tm_eff)
    if T_pad != T:
        x2d = jnp.pad(x2d, ((0, T_pad - T), (0, 0)))
    grid = (T_pad // tm_eff,)

    itemsize = jnp.dtype(x2d.dtype).itemsize
    cost = pl.CostEstimate(
        flops=2 * T_pad * (E * H + H * Cpad),
        transcendentals=0,
        bytes_accessed=(T_pad * E * itemsize + T_pad * Cpad * 4
                        + (E * H + H * Cpad) * itemsize + (H + Cpad) * 4),
    )

    out = pl.pallas_call(
        ner_kernel,
        out_shape=jax.ShapeDtypeStruct((T_pad, Cpad), jnp.float32),
        grid_spec=pltpu.PrefetchScalarGridSpec(
            num_scalar_prefetch=0,
            grid=grid,
            in_specs=[
                pl.BlockSpec((tm_eff, E), lambda i: (i, 0)),   # activations (tiled over tokens)
                # Weight/bias blocks have grid-invariant index maps; Mosaic keeps
                # them resident rather than re-DMAing per step.
                pl.BlockSpec((E, H), lambda i: (0, 0)),        # W1
                pl.BlockSpec((1, H), lambda i: (0, 0)),        # b1
                pl.BlockSpec((H, Cpad), lambda i: (0, 0)),     # fused W2 @ Wp (lane-padded)
                pl.BlockSpec((1, Cpad), lambda i: (0, 0)),     # fused b2 @ Wp (lane-padded)
            ],
            out_specs=pl.BlockSpec((tm_eff, Cpad), lambda i: (i, 0)),
        ),
        compiler_params=pltpu.CompilerParams(
            dimension_semantics=("parallel",)),
        cost_estimate=cost,
    )(x2d, w1, b1, w_fused, b_fused)
    return out[:T]


def fuse_and_pad_params(params, *, compute_dtype=jnp.float32):
    """Fuse W2@Wp / b2@Wp, pad output dim to a lane-dense 128 multiple, cast weights."""
    w1 = params["w1"].astype(compute_dtype)
    b1 = params["b1"].astype(jnp.float32)
    w_fused = (params["w2"] @ params["wp"]).astype(jnp.float32)   # (H, C)
    b_fused = (params["b2"] @ params["wp"]).astype(jnp.float32)   # (1, C)
    C = w_fused.shape[1]
    Cpad = max(LANE, _round_up(C, LANE))
    w_fused = jnp.pad(w_fused, ((0, 0), (0, Cpad - C))).astype(compute_dtype)
    b_fused = jnp.pad(b_fused, ((0, 0), (0, Cpad - C)))
    return w1, b1, w_fused, b_fused, C


def ner_model_apply(inputs, params, *, compute_dtype=jnp.float32, tm=512):
    """inputs: (B, S, E) -> logits (B, S, num_classes). Mirrors NERModel.forward."""
    B, S, E = inputs.shape
    w1, b1, w_fused, b_fused, C = fuse_and_pad_params(params, compute_dtype=compute_dtype)
    x2d = inputs.reshape(B * S, E).astype(compute_dtype)
    out = ner_forward(x2d, w1, b1, w_fused, b_fused, tm=tm)
    return out[:, :C].reshape(B, S, C)


def init_params(key, embedding_dim, num_classes,
                hidden_dim=256, prototype_embeddings_dim=8):
    # Deterministic synthetic parameters (shapes match NERModel.__init__).
    k1, k2, k3, k4, k5 = jax.random.split(key, 5)
    E, H, P, C = embedding_dim, hidden_dim, prototype_embeddings_dim, num_classes
    # PyTorch Linear computes x @ W.T + b with W of shape (out, in); we store the
    # already-transposed (in, out) matrices.  prottypes = nn.Linear(num_classes, P)
    # has .weight of shape (P, num_classes) and forward uses x @ weight directly,
    # so wp is stored as (P, C).
    w1 = jax.random.normal(k1, (E, H), jnp.float32) * 0.05
    b1 = jax.random.normal(k2, (1, H), jnp.float32) * 0.05
    w2 = jax.random.normal(k3, (H, P), jnp.float32) * 0.05
    b2 = jax.random.normal(k4, (1, P), jnp.float32) * 0.05
    wp = jax.random.normal(k5, (P, C), jnp.float32) * 0.05
    return {"w1": w1, "b1": b1, "w2": w2, "b2": b2, "wp": wp}


def reference_forward(inputs, params):
    # Unfused reference (dropout -> identity, inference semantics).
    x = inputs
    h = jnp.maximum(x @ params["w1"] + params["b1"], 0.0)
    e = h @ params["w2"] + params["b2"]
    return e @ params["wp"]


if __name__ == "__main__":
    B, S, E = 2, 8, 32          # batch=2, seq=8, embedding_dim=32
    num_classes = 5
    key = jax.random.PRNGKey(0)
    k_in, k_par = jax.random.split(key)

    inputs = jax.random.normal(k_in, (B, S, E), jnp.float32)
    params = init_params(k_par, E, num_classes)
    ref = reference_forward(inputs, params)

    # f32 operand path: matches the unfused reference to tight tolerance
    # (W2@Wp fusion is exact up to f32 rounding).
    out = jax.block_until_ready(
        ner_model_apply(inputs, params, compute_dtype=jnp.float32))
    assert out.shape == (B, S, num_classes)
    assert jnp.allclose(out, ref, atol=1e-5, rtol=1e-5), "f32 mismatch vs reference"

    # bf16 operand path (MXU-friendly on v6e/v7x), f32 accumulation in-kernel.
    out_bf16 = jax.block_until_ready(
        ner_model_apply(inputs, params, compute_dtype=jnp.bfloat16))
    assert out_bf16.shape == (B, S, num_classes)
    assert jnp.allclose(out_bf16, ref, atol=1e-2, rtol=1e-2), "bf16 mismatch vs reference"

    print("KERNEL_OK")
</pallas_src>

<mosaic_0001>
module attributes {stable_mosaic.version = 11 : i64} {
  func.func @ner_kernel(%arg0: i32, %arg1: memref<8x32xf32, #tpu.memory_space<vmem>>, %arg2: memref<32x256xf32, #tpu.memory_space<vmem>>, %arg3: memref<1x256xf32, #tpu.memory_space<vmem>>, %arg4: memref<256x128xf32, #tpu.memory_space<vmem>>, %arg5: memref<1x128xf32, #tpu.memory_space<vmem>>, %arg6: memref<8x128xf32, #tpu.memory_space<vmem>>) attributes {dimension_semantics = [#tpu.dimension_semantics<parallel>], iteration_bounds = array<i64: 2>, scalar_prefetch = 0 : i64, scratch_operands = 0 : i64, tpu.core_type = #tpu.core_type<tc>, window_params = [{transform_indices = @transform_0, window_bounds = array<i64: 8, 32>}, {pipeline_mode = #tpu.pipeline_mode<synchronous>, transform_indices = @transform_1, window_bounds = array<i64: 32, 256>}, {pipeline_mode = #tpu.pipeline_mode<synchronous>, transform_indices = @transform_2, window_bounds = array<i64: 1, 256>}, {pipeline_mode = #tpu.pipeline_mode<synchronous>, transform_indices = @transform_3, window_bounds = array<i64: 256, 128>}, {pipeline_mode = #tpu.pipeline_mode<synchronous>, transform_indices = @transform_4, window_bounds = array<i64: 1, 128>}, {transform_indices = @transform_5, window_bounds = array<i64: 8, 128>}]} {
    %c0 = arith.constant 0 : index
    %c0_0 = arith.constant 0 : index
    %0 = vector.load %arg1[%c0, %c0_0] : memref<8x32xf32, #tpu.memory_space<vmem>>, vector<8x32xf32>
    %c0_1 = arith.constant 0 : index
    %c0_2 = arith.constant 0 : index
    %1 = vector.load %arg2[%c0_1, %c0_2] : memref<32x256xf32, #tpu.memory_space<vmem>>, vector<32x256xf32>
    %cst = arith.constant dense<0.000000e+00> : vector<8x256xf32>
    %2 = tpu.matmul %0, %1, %cst {dimension_numbers = #tpu.dot_dimension_numbers<[1], [0], [0], [1], [0, 0, 1, 1], [], []>} : vector<8x32xf32>, vector<32x256xf32>, vector<8x256xf32> -> vector<8x256xf32>
    %c0_3 = arith.constant 0 : index
    %c0_4 = arith.constant 0 : index
    %3 = vector.load %arg3[%c0_3, %c0_4] : memref<1x256xf32, #tpu.memory_space<vmem>>, vector<1x256xf32>
    %4 = vector.broadcast %3 : vector<1x256xf32> to vector<8x256xf32>
    %5 = arith.addf %2, %4 : vector<8x256xf32>
    %cst_5 = arith.constant 0.000000e+00 : f32
    %6 = vector.broadcast %cst_5 : f32 to vector<8x256xf32>
    %7 = arith.maximumf %5, %6 : vector<8x256xf32>
    %c0_6 = arith.constant 0 : index
    %c0_7 = arith.constant 0 : index
    %8 = vector.load %arg4[%c0_6, %c0_7] : memref<256x128xf32, #tpu.memory_space<vmem>>, vector<256x128xf32>
    %cst_8 = arith.constant dense<0.000000e+00> : vector<8x128xf32>
    %9 = tpu.matmul %7, %8, %cst_8 {dimension_numbers = #tpu.dot_dimension_numbers<[1], [0], [0], [1], [0, 0, 1, 1], [], []>} : vector<8x256xf32>, vector<256x128xf32>, vector<8x128xf32> -> vector<8x128xf32>
    %c0_9 = arith.constant 0 : index
    %c0_10 = arith.constant 0 : index
    %10 = vector.load %arg5[%c0_9, %c0_10] : memref<1x128xf32, #tpu.memory_space<vmem>>, vector<1x128xf32>
    %11 = vector.broadcast %10 : vector<1x128xf32> to vector<8x128xf32>
    %12 = arith.addf %9, %11 : vector<8x128xf32>
    %c0_11 = arith.constant 0 : index
    %c0_12 = arith.constant 0 : index
    %13 = vector.load %arg6[%c0_11, %c0_12] : memref<8x128xf32, #tpu.memory_space<vmem>>, vector<8x128xf32>
    tpu.vector_store %arg6[%c0_11, %c0_12], %12 {strides = array<i32>} : memref<8x128xf32, #tpu.memory_space<vmem>>, vector<8x128xf32>,
    return
  }
  func.func @transform_0(%arg0: i32) -> (i32, i32) {
    %c0_i32 = arith.constant 0 : i32
    %c0_i32_0 = arith.constant 0 : i32
    return %arg0, %c0_i32 : i32, i32
  }
  func.func @transform_1(%arg0: i32) -> (i32, i32) {
    %c0_i32 = arith.constant 0 : i32
    %c0_i32_0 = arith.constant 0 : i32
    %c0_i32_1 = arith.constant 0 : i32
    return %c0_i32, %c0_i32_0 : i32, i32
  }
  func.func @transform_2(%arg0: i32) -> (i32, i32) {
    %c0_i32 = arith.constant 0 : i32
    %c0_i32_0 = arith.constant 0 : i32
    %c0_i32_1 = arith.constant 0 : i32
    return %c0_i32, %c0_i32_0 : i32, i32
  }
  func.func @transform_3(%arg0: i32) -> (i32, i32) {
    %c0_i32 = arith.constant 0 : i32
    %c0_i32_0 = arith.constant 0 : i32
    %c0_i32_1 = arith.constant 0 : i32
    return %c0_i32, %c0_i32_0 : i32, i32
  }
  func.func @transform_4(%arg0: i32) -> (i32, i32) {
    %c0_i32 = arith.constant 0 : i32
    %c0_i32_0 = arith.constant 0 : i32
    %c0_i32_1 = arith.constant 0 : i32
    return %c0_i32, %c0_i32_0 : i32, i32
  }
  func.func @transform_5(%arg0: i32) -> (i32, i32) {
    %c0_i32 = arith.constant 0 : i32
    %c0_i32_0 = arith.constant 0 : i32
    return %arg0, %c0_i32 : i32, i32
  }
}

</mosaic_0001>

<llo_original>
// kernel: tpu_custom_call.1
$region0: #{tpu_custom_call.1}
  #allocation0 [shape = 'u32[]', space=smem, size = 0x4, offset = 0x4, fixed_abs, tag = 'smem constant byte address 0x4 - core index']
  #allocation1 [shape = 'u32[72,128]{1,0:T(1,128)}', space=vmem, size = 0x9000, scoped, tag = 'internal scratch']
  %s0 = inlined_call_operand.hbm [shape: f32[16,32], index: 0, kind: input, shape index: {}]
  %s1 = inlined_call_operand.hbm [shape: f32[32,256], index: 1, kind: input, shape index: {}]
  %s2 = inlined_call_operand.hbm [shape: f32[1,256], index: 2, kind: input, shape index: {}]
  %s3 = inlined_call_operand.hbm [shape: f32[256,128], index: 3, kind: input, shape index: {}]
  %s4 = inlined_call_operand.vmem [shape: f32[1,128], index: 4, kind: input, shape index: {}]
  %s5 = inlined_call_operand.hbm [shape: f32[16,128], index: 5, kind: output, shape index: {}]
  %s6 = sld [smem:[#allocation0]]
  $region69: #{tpu_custom_call.1} parent=0
    _
  %s8 = ssub.s32 1, %s6
  %s9 = scalar_select 0, %s8, %s6
  $region1: #{tpu_custom_call.1} parent=0
    #allocation2 [shape = 'u8[8192]{0}', space=vmem, size = 0x2000, scoped, tag = 'input window, operand 0']
    #allocation3 [shape = 's32[2]{0}', space=sflag, size = 0x8, scoped, tag = 'scoped memory for tpu_custom_call.1']
    #allocation4 [shape = 's32[2]{0}', space=sflag, size = 0x8, scoped, tag = 'scoped memory for tpu_custom_call.1']
    #allocation5 [shape = 'u8[32768]{0}', space=vmem, size = 0x8000, scoped, tag = 'input window, operand 1, single buffered']
    #allocation6 [shape = 's32[1]{0}', space=sflag, size = 0x4, scoped, tag = 'scoped memory for tpu_custom_call.1']
    #allocation7 [shape = 'u8[1024]{0}', space=vmem, size = 0x400, scoped, tag = 'input window, operand 2, single buffered']
    #allocation8 [shape = 'u8[131072]{0}', space=vmem, size = 0x20000, scoped, tag = 'input window, operand 3, single buffered']
    #allocation9 [shape = 's32[1]{0}', space=sflag, size = 0x4, scoped, tag = 'scoped memory for tpu_custom_call.1']
    #allocation10 [shape = 'u8[8192]{0}', space=vmem, size = 0x2000, scoped, tag = 'output window, operand 0']
    %10 = vsyncpa [#allocation3], 0
    %s11 = scalar_lea.sflag [#allocation3], 1
    %12 = vsyncpa %s11, 0
    %13 = vsyncpa [#allocation6], 0
    %14 = vsyncpa [#allocation9], 0
    %15 = vsyncpa [#allocation4], 0
    %s16 = scalar_lea.sflag [#allocation4], 1
    %17 = vsyncpa %s16, 0
    loop: start=0, step=1, limit=4
    $region2: #{tpu_custom_call.1} parent=1 // loop_pre_header
      _
    $region3: #{tpu_custom_call.1} parent=1 // loop_header
      %s19 = sphi 0, %s23
      %p20 = scmp.ge.s32.totalorder %s19, 4
      %s29 = sphi 0, %s31
      %s32 = sphi 0, %s29
      %s33 = sphi 0, %s32
      %s49 = sphi 0, %s33
      %s53 = sphi 0, %s53
      %s55 = sphi 0, %s53
      %s56 = sphi 0, %s55
      %s70 = sphi 0, %s56
      %s74 = sphi 0, %s74
      %s76 = sphi 0, %s74
      %s77 = sphi 0, %s76
      %s91 = sphi 0, %s77
      %s95 = sphi 0, %s95
      %s97 = sphi 0, %s95
      %s98 = sphi 0, %s97
      %s112 = sphi 0, %s98
      %s116 = sphi 0, %s116
      %s118 = sphi 0, %s116
      %s119 = sphi 0, %s118
      %s133 = sphi 0, %s119
      %s139 = sphi 0, %s141
      %s142 = sphi 0, %s139
      %s143 = sphi 0, %s142
      %s159 = sphi 0, %s143
    $region4: #{tpu_custom_call.1} parent=1 // loop_header_branch
      %22 = sbr.rel (%p20) target = $region8
    $region5: #{tpu_custom_call.1} parent=1 // loop_body
      %s24 = ssub.s32 %s19, 1
      %s25 = ssub.s32 %s19, 2
      %s26 = sadd.s32 %s19, 1
      %s27 = ssub.s32 %s19, %s26
      %p28 = scmp.eq.s32.totalorder %s27, 0
      %s30 = sadd.s32 %s29, 1
      %s31 = scalar_select %p28, %s29, %s30
      %p34 = pneg %p28
      %p35 = scmp.eq.s32.totalorder %s19, 1
      %p36 = por %p34, %p35
      %p37 = scmp.ne.s32.totalorder %s29, %s32
      %p38 = scmp.eq.s32.totalorder %s19, 0
      %p39 = por %p37, %p38
      %p40 = scmp.ne.s32.totalorder %s29, %s32
      %p41 = scmp.eq.s32.totalorder %s24, 1
      %p42 = por %p40, %p41
      %p43 = scmp.ne.s32.totalorder %s32, %s33
      %p44 = scmp.eq.s32.totalorder %s24, 0
      %p45 = por %p43, %p44
      %p46 = scmp.ne.s32.totalorder %s32, %s33
      %p47 = scmp.eq.s32.totalorder %s25, 1
      %p48 = por %p46, %p47
      %p50 = scmp.ne.s32.totalorder %s33, %s49
      %p51 = scmp.eq.s32.totalorder %s25, 0
      %p52 = por %p50, %p51
      %s54 = sadd.s32 %s53, 1
      %p57 = scmp.eq.s32.totalorder %s19, 1
      %p58 = scmp.ne.s32.totalorder %s53, %s55
      %p59 = scmp.eq.s32.totalorder %s19, 0
      %p60 = por %p58, %p59
      %p61 = scmp.ne.s32.totalorder %s53, %s55
      %p62 = scmp.eq.s32.totalorder %s24, 1
      %p63 = por %p61, %p62
      %p64 = scmp.ne.s32.totalorder %s55, %s56
      %p65 = scmp.eq.s32.totalorder %s24, 0
      %p66 = por %p64, %p65
      %p67 = scmp.ne.s32.totalorder %s55, %s56
      %p68 = scmp.eq.s32.totalorder %s25, 1
      %p69 = por %p67, %p68
      %p71 = scmp.ne.s32.totalorder %s56, %s70
      %p72 = scmp.eq.s32.totalorder %s25, 0
      %p73 = por %p71, %p72
      %s75 = sadd.s32 %s74, 1
      %p78 = scmp.eq.s32.totalorder %s19, 1
      %p79 = scmp.ne.s32.totalorder %s74, %s76
      %p80 = scmp.eq.s32.totalorder %s19, 0
      %p81 = por %p79, %p80
      %p82 = scmp.ne.s32.totalorder %s74, %s76
      %p83 = scmp.eq.s32.totalorder %s24, 1
      %p84 = por %p82, %p83
      %p85 = scmp.ne.s32.totalorder %s76, %s77
      %p86 = scmp.eq.s32.totalorder %s24, 0
      %p87 = por %p85, %p86
      %p88 = scmp.ne.s32.totalorder %s76, %s77
      %p89 = scmp.eq.s32.totalorder %s25, 1
      %p90 = por %p88, %p89
      %p92 = scmp.ne.s32.totalorder %s77, %s91
      %p93 = scmp.eq.s32.totalorder %s25, 0
      %p94 = por %p92, %p93
      %s96 = sadd.s32 %s95, 1
      %p99 = scmp.eq.s32.totalorder %s19, 1
      %p100 = scmp.ne.s32.totalorder %s95, %s97
      %p101 = scmp.eq.s32.totalorder %s19, 0
      %p102 = por %p100, %p101
      %p103 = scmp.ne.s32.totalorder %s95, %s97
      %p104 = scmp.eq.s32.totalorder %s24, 1
      %p105 = por %p103, %p104
      %p106 = scmp.ne.s32.totalorder %s97, %s98
      %p107 = scmp.eq.s32.totalorder %s24, 0
      %p108 = por %p106, %p107
      %p109 = scmp.ne.s32.totalorder %s97, %s98
      %p110 = scmp.eq.s32.totalorder %s25, 1
      %p111 = por %p109, %p110
      %p113 = scmp.ne.s32.totalorder %s98, %s112
      %p114 = scmp.eq.s32.totalorder %s25, 0
      %p115 = por %p113, %p114
      %s117 = sadd.s32 %s116, 1
      %p120 = scmp.eq.s32.totalorder %s19, 1
      %p121 = scmp.ne.s32.totalorder %s116, %s118
      %p122 = scmp.eq.s32.totalorder %s19, 0
      %p123 = por %p121, %p122
      %p124 = scmp.ne.s32.totalorder %s116, %s118
      %p125 = scmp.eq.s32.totalorder %s24, 1
      %p126 = por %p124, %p125
      %p127 = scmp.ne.s32.totalorder %s118, %s119
      %p128 = scmp.eq.s32.totalorder %s24, 0
      %p129 = por %p127, %p128
      %p130 = scmp.ne.s32.totalorder %s118, %s119
      %p131 = scmp.eq.s32.totalorder %s25, 1
      %p132 = por %p130, %p131
      %p134 = scmp.ne.s32.totalorder %s119, %s133
      %p135 = scmp.eq.s32.totalorder %s25, 0
      %p136 = por %p134, %p135
      %s137 = ssub.s32 %s19, %s26
      %p138 = scmp.eq.s32.totalorder %s137, 0
      %s140 = sadd.s32 %s139, 1
      %s141 = scalar_select %p138, %s139, %s140
      %p144 = pneg %p138
      %p145 = scmp.eq.s32.totalorder %s19, 1
      %p146 = por %p144, %p145
      %p147 = scmp.ne.s32.totalorder %s139, %s142
      %p148 = scmp.eq.s32.totalorder %s19, 0
      %p149 = por %p147, %p148
      %p150 = scmp.ne.s32.totalorder %s139, %s142
      %p151 = scmp.eq.s32.totalorder %s24, 1
      %p152 = por %p150, %p151
      %p153 = scmp.ne.s32.totalorder %s142, %s143
      %p154 = scmp.eq.s32.totalorder %s24, 0
      %p155 = por %p153, %p154
      %p156 = scmp.ne.s32.totalorder %s142, %s143
      %p157 = scmp.eq.s32.totalorder %s25, 1
      %p158 = por %p156, %p157
      %p160 = scmp.ne.s32.totalorder %s143, %s159
      %p161 = scmp.eq.s32.totalorder %s25, 0
      %p162 = por %p160, %p161
      %p163 = scmp.le.s32.totalorder 1, %s19
      %p164 = scmp.lt.s32.totalorder %s19, 3
      %p165 = pnand %p163, %p164
      %p166 = pneg %p165
      // Predicated region
      $region9: #{tpu_custom_call.1} parent=5 // pred_check
        _
      $region10: #{tpu_custom_call.1} parent=5 // pred_check_branch
        %168 = sbr.rel (%p165) target = $region12
      $region11: #{tpu_custom_call.1} parent=5 // pred_region
        %s169 = ssub.s32 %s19, 1
        // Predicated region
        $region13: #{tpu_custom_call.1} parent=11 // pred_check
          %p170 = pneg %p66
        $region14: #{tpu_custom_call.1} parent=11 // pred_check_branch
          %172 = sbr.rel (%p170) target = $region16
        $region15: #{tpu_custom_call.1} parent=11 // pred_region
          %174 = vsyncadd [#allocation6], 0
          %s175 = sshll.u32 %s1, 4
          %s176 = int_to_ptr.hbm [resolvable:$true] %s175
          %s177 = sshll.u32 [#allocation5], 4
          %s178 = int_to_ptr.vmem [resolvable:$true] %s177
          %183 = dma.hbm_to_vmem [thread:$0]  %s176, 1024, %s178, [#allocation6], 256, 256, 16
        $region16: #{tpu_custom_call.1} parent=11 // pred_fallthru
          _
        // Predicated region
        $region17: #{tpu_custom_call.1} parent=11 // pred_check
          %p184 = pneg %p87
        $region18: #{tpu_custom_call.1} parent=11 // pred_check_branch
          %186 = sbr.rel (%p184) target = $region20
        $region19: #{tpu_custom_call.1} parent=11 // pred_region
          %188 = vsyncadd [#allocation6], 0
          %s190 = sshll.u32 %s2, 4
          %s191 = int_to_ptr.hbm [resolvable:$true] %s190
          %s192 = sshll.u32 [#allocation7], 4
          %s193 = int_to_ptr.vmem [resolvable:$true] %s192
          %195 = dma.hbm_to_vmem [thread:$0]  %s191, 32, %s193, [#allocation6]
        $region20: #{tpu_custom_call.1} parent=11 // pred_fallthru
          _
        // Predicated region
        $region21: #{tpu_custom_call.1} parent=11 // pred_check
          %p196 = pneg %p108
        $region22: #{tpu_custom_call.1} parent=11 // pred_check_branch
          %198 = sbr.rel (%p196) target = $region24
        $region23: #{tpu_custom_call.1} parent=11 // pred_region
          %200 = vsyncadd [#allocation9], 0
          %s201 = sshll.u32 %s3, 4
          %s202 = int_to_ptr.hbm [resolvable:$true] %s201
          %s203 = sshll.u32 [#allocation8], 4
          %s204 = int_to_ptr.vmem [resolvable:$true] %s203
          %209 = dma.hbm_to_vmem [thread:$0]  %s202, 4096, %s204, [#allocation9], 128, 128, 8
        $region24: #{tpu_custom_call.1} parent=11 // pred_fallthru
          _
        // Predicated region
        $region25: #{tpu_custom_call.1} parent=11 // pred_check
          %p210 = pneg %p129
        $region26: #{tpu_custom_call.1} parent=11 // pred_check_branch
          %212 = sbr.rel (%p210) target = $region28
        $region27: #{tpu_custom_call.1} parent=11 // pred_region
          _
        $region28: #{tpu_custom_call.1} parent=11 // pred_fallthru
          _
      $region12: #{tpu_custom_call.1} parent=5 // pred_fallthru
        _
      %p213 = scmp.lt.s32.totalorder %s19, 2
      // Predicated region
      $region29: #{tpu_custom_call.1} parent=5 // pred_check
        %p214 = pneg %p213
      $region30: #{tpu_custom_call.1} parent=5 // pred_check_branch
        %216 = sbr.rel (%p214) target = $region32
      $region31: #{tpu_custom_call.1} parent=5 // pred_region
        // Predicated region
        $region33: #{tpu_custom_call.1} parent=31 // pred_check
          %p217 = pneg %p39
        $region34: #{tpu_custom_call.1} parent=31 // pred_check_branch
          %219 = sbr.rel (%p217) target = $region36
        $region35: #{tpu_custom_call.1} parent=31 // pred_region
          %s220 = sand.u32 %s29, 1
          %s221 = scalar_lea.sflag [#allocation3], %s220
          %s222 = sand.u32 %s29, 1
          %s223 = smul.addr %s222, 8
          %s224 = scalar_lea.vmem [#allocation2], %s223
          %226 = vsyncadd %s221, 0
          %s227 = smul.addr %s19, 8
          %s228 = scalar_lea.hbm %s0, %s227
          %s230 = sshll.u32 %s228, 4
          %s231 = int_to_ptr.hbm [resolvable:$true] %s230
          %s232 = sshll.u32 %s224, 4
          %s233 = int_to_ptr.vmem [resolvable:$true] %s232
          %235 = dma.hbm_to_vmem [thread:$0]  %s231, 128, %s233, %s221
        $region36: #{tpu_custom_call.1} parent=31 // pred_fallthru
          _
      $region32: #{tpu_custom_call.1} parent=5 // pred_fallthru
        _
      %p236 = scmp.le.s32.totalorder 1, %s19
      %p237 = scmp.lt.s32.totalorder %s19, 3
      %p238 = pnand %p236, %p237
      %p239 = pneg %p238
      // Predicated region
      $region37: #{tpu_custom_call.1} parent=5 // pred_check
        _
      $region38: #{tpu_custom_call.1} parent=5 // pred_check_branch
        %241 = sbr.rel (%p238) target = $region40
      $region39: #{tpu_custom_call.1} parent=5 // pred_region
        %s242 = ssub.s32 %s19, 1
        %s243 = sand.u32 %s32, 1
        %s244 = scalar_lea.sflag [#allocation3], %s243
        %s245 = sand.u32 %s32, 1
        %s246 = smul.addr %s245, 8
        %s247 = scalar_lea.vmem [#allocation2], %s246
        // Predicated region
        $region41: #{tpu_custom_call.1} parent=39 // pred_check
          %p248 = pneg %p45
        $region42: #{tpu_custom_call.1} parent=39 // pred_check_branch
          %250 = sbr.rel (%p248) target = $region44
        $region43: #{tpu_custom_call.1} parent=39 // pred_region
          %252 = dma.done %s244, 128
        $region44: #{tpu_custom_call.1} parent=39 // pred_fallthru
          _
        // Predicated region
        $region45: #{tpu_custom_call.1} parent=39 // pred_check
          %p253 = pneg %p66
        $region46: #{tpu_custom_call.1} parent=39 // pred_check_branch
          %255 = sbr.rel (%p253) target = $region48
        $region47: #{tpu_custom_call.1} parent=39 // pred_region
          %257 = dma.done [#allocation6], 1024
        $region48: #{tpu_custom_call.1} parent=39 // pred_fallthru
          _
        // Predicated region
        $region49: #{tpu_custom_call.1} parent=39 // pred_check
          %p258 = pneg %p87
        $region50: #{tpu_custom_call.1} parent=39 // pred_check_branch
          %260 = sbr.rel (%p258) target = $region52
        $region51: #{tpu_custom_call.1} parent=39 // pred_region
          %262 = dma.done [#allocation6], 32
        $region52: #{tpu_custom_call.1} parent=39 // pred_fallthru
          _
        // Predicated region
        $region53: #{tpu_custom_call.1} parent=39 // pred_check
          %p263 = pneg %p108
        $region54: #{tpu_custom_call.1} parent=39 // pred_check_branch
          %265 = sbr.rel (%p263) target = $region56
        $region55: #{tpu_custom_call.1} parent=39 // pred_region
          %267 = dma.done [#allocation9], 4096
        $region56: #{tpu_custom_call.1} parent=39 // pred_fallthru
          _
        %s268 = sand.u32 %s32, 1
        %s269 = scalar_lea.sflag [#allocation3], %s268
        %s270 = sand.u32 %s32, 1
        %s271 = smul.addr %s270, 8
        %s272 = scalar_lea.vmem [#allocation2], %s271
        %p273 = pneg %p45
        %p274 = pneg %p42
        %p275 = pneg %p66
        %p276 = pneg %p63
        %p277 = pneg %p87
        %p278 = pneg %p84
        %p279 = pneg %p108
        %p280 = pneg %p105
        %p281 = pneg %p129
        %p282 = pneg %p126
        %p283 = pneg %p155
        %p284 = pneg %p152
        %s285 = sand.u32 %s142, 1
        %s286 = scalar_lea.sflag [#allocation4], %s285
        %s287 = sand.u32 %s142, 1
        %s288 = smul.addr %s287, 8
        %s289 = scalar_lea.vmem [#allocation10], %s288
        %v290 = vld [vmem:[%s247] sm:$0xff]
        %v291 = vld [vmem:[#allocation5] sm:$0xff]
        %v292 = vld [vmem:[#allocation5 + $0x8] sm:$0xff]
        %v293 = vld [vmem:[#allocation5 + $0x10] sm:$0xff]
        %v294 = vld [vmem:[#allocation5 + $0x18] sm:$0xff]
        %v295 = vld [vmem:[#allocation5 + $0x20] sm:$0xff]
        %v296 = vld [vmem:[#allocation5 + $0x28] sm:$0xff]
        %v297 = vld [vmem:[#allocation5 + $0x30] sm:$0xff]
        %v298 = vld [vmem:[#allocation5 + $0x38] sm:$0xff]
        %v299 = vld [vmem:[#allocation7] sm:$0x3]
        %v301 = vperm.slane %v299, 0
        %v302 = vperm.slane %v299, 1
        %vm305 = vcmask 261120
        %v307 = vsel %vm305, %v290, 0
        %309 = vmatpush.msra.mxu0 0.0
        %310 = vmatpush.msra.mxu0 0.0
        %311 = vmatpush.msra.mxu0 0.0
        %312 = vmatpush.msra.mxu0 0.0
        %313 = vmatpush.msra.mxu0 0.0
        %314 = vmatpush.msra.mxu0 0.0
        %315 = vmatpush.msra.mxu0 0.0
        %316 = vmatpush.msra.mxu0 0.0
        %317 = vmatpush.msra.mxu0 0.0
        %318 = vmatpush.msra.mxu0 0.0
        %319 = vmatpush.msra.mxu0 0.0
        %320 = vmatpush.msra.mxu0 0.0
        %321 = vmatpush.msra.mxu0 %v297
        %322 = vmatpush.msra.mxu0 %v295
        %323 = vmatpush.msra.mxu0 %v293
        %324 = vmatpush.msra.mxu0 %v291
        %325 = vmatmul.f32.gmra.mxu0 %v307
        %v326 = vpop.f32.mrf.mxu0
        %v327 = vadd.f32 %v301, %v326
        %328 = vdwg.mxu0
        %329 = vmatpush.msra.mxu0 0.0
        %330 = vmatpush.msra.mxu0 0.0
        %331 = vmatpush.msra.mxu0 0.0
        %332 = vmatpush.msra.mxu0 0.0
        %333 = vmatpush.msra.mxu0 0.0
        %334 = vmatpush.msra.mxu0 0.0
        %335 = vmatpush.msra.mxu0 0.0
        %336 = vmatpush.msra.mxu0 0.0
        %337 = vmatpush.msra.mxu0 0.0
        %338 = vmatpush.msra.mxu0 0.0
        %339 = vmatpush.msra.mxu0 0.0
        %340 = vmatpush.msra.mxu0 0.0
        %341 = vmatpush.msra.mxu0 %v298
        %342 = vmatpush.msra.mxu0 %v296
        %343 = vmatpush.msra.mxu0 %v294
        %344 = vmatpush.msra.mxu0 %v292
        %345 = vmatmul.f32.gmra.mxu0 %v307
        %v346 = vpop.f32.mrf.mxu0
        %v347 = vadd.f32 %v302, %v346
        %348 = vdwg.mxu0
        %v349 = vmax.f32 %v327, 0.0
        %v350 = vmax.f32 %v347, 0.0
        %v351 = vld [vmem:[#allocation8] sm:$0xff]
        %v352 = vld [vmem:[#allocation8 + $0x8] sm:$0xff]
        %v353 = vld [vmem:[#allocation8 + $0x10] sm:$0xff]
        %v354 = vld [vmem:[#allocation8 + $0x18] sm:$0xff]
        %v355 = vld [vmem:[#allocation8 + $0x20] sm:$0xff]
        %v356 = vld [vmem:[#allocation8 + $0x28] sm:$0xff]
        %v357 = vld [vmem:[#allocation8 + $0x30] sm:$0xff]
        %v358 = vld [vmem:[#allocation8 + $0x38] sm:$0xff]
        %v359 = vld [vmem:[#allocation8 + $0x40] sm:$0xff]
        %v360 = vld [vmem:[#allocation8 + $0x48] sm:$0xff]
        %v361 = vld [vmem:[#allocation8 + $0x50] sm:$0xff]
        %v362 = vld [vmem:[#allocation8 + $0x58] sm:$0xff]
        %v363 = vld [vmem:[#allocation8 + $0x60] sm:$0xff]
        %v364 = vld [vmem:[#allocation8 + $0x68] sm:$0xff]
        %v365 = vld [vmem:[#allocation8 + $0x70] sm:$0xff]
        %v366 = vld [vmem:[#allocation8 + $0x78] sm:$0xff]
        %v367 = vld [vmem:[#allocation8 + $0x80] sm:$0xff]
        %v368 = vld [vmem:[#allocation8 + $0x88] sm:$0xff]
        %v369 = vld [vmem:[#allocation8 + $0x90] sm:$0xff]
        %v370 = vld [vmem:[#allocation8 + $0x98] sm:$0xff]
        %v371 = vld [vmem:[#allocation8 + $0xa0] sm:$0xff]
        %v372 = vld [vmem:[#allocation8 + $0xa8] sm:$0xff]
        %v373 = vld [vmem:[#allocation8 + $0xb0] sm:$0xff]
        %v374 = vld [vmem:[#allocation8 + $0xb8] sm:$0xff]
        %v375 = vld [vmem:[#allocation8 + $0xc0] sm:$0xff]
        %v376 = vld [vmem:[#allocation8 + $0xc8] sm:$0xff]
        %v377 = vld [vmem:[#allocation8 + $0xd0] sm:$0xff]
        %v378 = vld [vmem:[#allocation8 + $0xd8] sm:$0xff]
        %v379 = vld [vmem:[#allocation8 + $0xe0] sm:$0xff]
        %v380 = vld [vmem:[#allocation8 + $0xe8] sm:$0xff]
        %v381 = vld [vmem:[#allocation8 + $0xf0] sm:$0xff]
        %v382 = vld [vmem:[#allocation8 + $0xf8] sm:$0xff]
        %v383 = vld [vmem:[%s4] sm:$0x1]
        %v385 = vperm.slane %v383, 0
        %387 = vmatpush.msra.mxu0 %v366
        %388 = vmatpush.msra.mxu0 %v365
        %389 = vmatpush.msra.mxu0 %v364
        %390 = vmatpush.msra.mxu0 %v363
        %391 = vmatpush.msra.mxu0 %v362
        %392 = vmatpush.msra.mxu0 %v361
        %393 = vmatpush.msra.mxu0 %v360
        %394 = vmatpush.msra.mxu0 %v359
        %395 = vmatpush.msra.mxu0 %v358
        %396 = vmatpush.msra.mxu0 %v357
        %397 = vmatpush.msra.mxu0 %v356
        %398 = vmatpush.msra.mxu0 %v355
        %399 = vmatpush.msra.mxu0 %v354
        %400 = vmatpush.msra.mxu0 %v353
        %401 = vmatpush.msra.mxu0 %v352
        %402 = vmatpush.msra.mxu0 %v351
        %403 = vmatmul.f32.gmra.mxu0 %v349
        %v404 = vpop.f32.mrf.mxu0
        %v405 = vadd.f32 %v385, %v404
        %406 = vdwg.mxu0
        %407 = vmatpush.msra.mxu0 %v382
        %408 = vmatpush.msra.mxu0 %v381
        %409 = vmatpush.msra.mxu0 %v380
        %410 = vmatpush.msra.mxu0 %v379
        %411 = vmatpush.msra.mxu0 %v378
        %412 = vmatpush.msra.mxu0 %v377
        %413 = vmatpush.msra.mxu0 %v376
        %414 = vmatpush.msra.mxu0 %v375
        %415 = vmatpush.msra.mxu0 %v374
        %416 = vmatpush.msra.mxu0 %v373
        %417 = vmatpush.msra.mxu0 %v372
        %418 = vmatpush.msra.mxu0 %v371
        %419 = vmatpush.msra.mxu0 %v370
        %420 = vmatpush.msra.mxu0 %v369
        %421 = vmatpush.msra.mxu0 %v368
        %422 = vmatpush.msra.mxu0 %v367
        %423 = vmatmul.f32.gmra.mxu0 %v350
        %v424 = vpop.f32.mrf.mxu0
        %v425 = vadd.f32 %v405, %v424
        %426 = vdwg.mxu0
        %427 = vst [vmem:[%s289] sm:$0xff] %v425
        %s428 = sand.u32 %s142, 1
        %s429 = scalar_lea.sflag [#allocation4], %s428
        %s430 = sand.u32 %s142, 1
        %s431 = smul.addr %s430, 8
        %s432 = scalar_lea.vmem [#allocation10], %s431
        // Predicated region
        $region57: #{tpu_custom_call.1} parent=39 // pred_check
          %p433 = pneg %p152
        $region58: #{tpu_custom_call.1} parent=39 // pred_check_branch
          %435 = sbr.rel (%p433) target = $region60
        $region59: #{tpu_custom_call.1} parent=39 // pred_region
          %437 = vsyncadd %s429, 0
          %s438 = smul.addr %s24, 8
          %s439 = scalar_lea.hbm %s5, %s438
          %s441 = sshll.u32 %s432, 4
          %s442 = int_to_ptr.vmem [resolvable:$true] %s441
          %s443 = sshll.u32 %s439, 4
          %s444 = int_to_ptr.hbm [resolvable:$true] %s443
          %446 = dma.vmem_to_hbm [thread:$0]  %s442, 128, %s444, %s429
        $region60: #{tpu_custom_call.1} parent=39 // pred_fallthru
          _
      $region40: #{tpu_custom_call.1} parent=5 // pred_fallthru
        _
      %p447 = scmp.le.s32.totalorder 2, %s19
      // Predicated region
      $region61: #{tpu_custom_call.1} parent=5 // pred_check
        %p448 = pneg %p447
      $region62: #{tpu_custom_call.1} parent=5 // pred_check_branch
        %450 = sbr.rel (%p448) target = $region64
      $region63: #{tpu_custom_call.1} parent=5 // pred_region
        %s451 = ssub.s32 %s19, 2
        // Predicated region
        $region65: #{tpu_custom_call.1} parent=63 // pred_check
          %p452 = pneg %p158
        $region66: #{tpu_custom_call.1} parent=63 // pred_check_branch
          %454 = sbr.rel (%p452) target = $region68
        $region67: #{tpu_custom_call.1} parent=63 // pred_region
          %s455 = sand.u32 %s143, 1
          %s456 = scalar_lea.sflag [#allocation4], %s455
          %s457 = sand.u32 %s143, 1
          %s458 = smul.addr %s457, 8
          %s459 = scalar_lea.vmem [#allocation10], %s458
          %461 = dma.done %s456, 128
        $region68: #{tpu_custom_call.1} parent=63 // pred_fallthru
          _
      $region64: #{tpu_custom_call.1} parent=5 // pred_fallthru
        _
    $region6: #{tpu_custom_call.1} parent=1 // loop_footer
      %s23 = sadd.s32 1, %s19
    $region7: #{tpu_custom_call.1} parent=1 // loop_footer_branch
      %18 = sbr.rel target = $region3
    $region8: #{tpu_custom_call.1} parent=1 // loop_exit
      _
    %462 = vsyncpa [#allocation3], 1
    %s463 = scalar_lea.sflag [#allocation3], 1
    %464 = vsyncpa %s463, 1
    %465 = vsyncpa [#allocation6], 1
    %466 = vsyncpa [#allocation9], 1
    %467 = vsyncpa [#allocation4], 1
    %s468 = scalar_lea.sflag [#allocation4], 1
    %469 = vsyncpa %s468, 1

</llo_original>
